<compile_context>
chip_gen: v7x
topology: tpu7x:2x2x1
jax: 0.10.0
libtpu: 0.0.40
codegen_flags: <defaults>
</compile_context>

<pallas_src>
import functools
import math

import numpy as np
import jax
import jax.numpy as jnp
from jax.experimental import pallas as pl
from jax.experimental.pallas import tpu as pltpu  # noqa: F401  (TPU backend import parity)

# ----------------------- config (small, module-consistent) ------------------
D_MODEL = 32
FFN_HIDDEN = 64
NUM_HEADS = 4
NUM_LAYERS = 2
HEAD_DIM = D_MODEL // NUM_HEADS
BATCH = 16
EPS = 1e-5        # LayerNormalization eps
N_FEAT = 3 + 8 + 7  # fused encoder input features

# ------------------------- packed-slab row layout ----------------------------
# Slab A: width D_MODEL (32).  All blocks start on 8-row boundaries.
ENC_W_OFF = 0                       # 18 rows: fused encoder weight (18, 32)
ENC_B_OFF = 18                      # 1 row : fused encoder bias
LAYER0_OFF = 24                     # encoder block padded to 24 rows
# per-layer block: wattn (32 rows) | w2 (64 rows) | vec block (8 rows)
VEC_BATTN, VEC_G1, VEC_BE1, VEC_B2, VEC_G2, VEC_BE2 = 0, 1, 2, 3, 4, 5
LAYER_STRIDE_A = D_MODEL + FFN_HIDDEN + 8            # 104
HEAD_OFF = LAYER0_OFF + NUM_LAYERS * LAYER_STRIDE_A  # 232: [w_head_row, b_head_row, pad...]
A_ROWS = HEAD_OFF + 8                                # 240

# Slab B: width FFN_HIDDEN (64).  per-layer block: w1 (32 rows) | b1 block (8 rows)
LAYER_STRIDE_B = D_MODEL + 8                         # 40
B_ROWS = NUM_LAYERS * LAYER_STRIDE_B                 # 80


# ------------------------------- Pallas kernel ------------------------------
def transformer_kernel(feat_ref, wa_ref, wb_ref, out_ref):
    dot = functools.partial(jnp.dot, preferred_element_type=jnp.float32)

    def row(ref, r):
        # static single-row slice -> (1, W), broadcasts against (B, W)
        return ref[r:r + 1, :]

    def ln_norm(x):
        # biased variance via E[x^2] - E[x]^2: two independent XLU reductions,
        # rsqrt on the EUP slot.  Affine is applied by the caller (or folded).
        mean = jnp.mean(x, axis=-1, keepdims=True)
        mean_sq = jnp.mean(x * x, axis=-1, keepdims=True)
        var = mean_sq - mean * mean
        return (x - mean) * jax.lax.rsqrt(var + EPS)

    # ---- SpatiotemporalEnconder: pos/time/num linears fused into one matmul ----
    x = dot(feat_ref[...], wa_ref[ENC_W_OFF:ENC_W_OFF + N_FEAT, :]) \
        + row(wa_ref, ENC_B_OFF)                                     # (B, D)

    for l in range(NUM_LAYERS):
        a0 = LAYER0_OFF + l * LAYER_STRIDE_A
        vec = a0 + D_MODEL + FFN_HIDDEN
        b0 = l * LAYER_STRIDE_B

        # ---- multi-head self attention, seq_len == 1 (folded to one linear) ----
        resid = x
        attn = dot(x, wa_ref[a0:a0 + D_MODEL, :]) + row(wa_ref, vec + VEC_BATTN)
        x = row(wa_ref, vec + VEC_G1) * ln_norm(attn + resid) \
            + row(wa_ref, vec + VEC_BE1)

        # ---- position-wise feed-forward ----
        resid = x
        h = jnp.maximum(dot(x, wb_ref[b0:b0 + D_MODEL, :])
                        + row(wb_ref, b0 + D_MODEL), 0.0)            # (B, H)
        ff = dot(h, wa_ref[a0 + D_MODEL:a0 + D_MODEL + FFN_HIDDEN, :]) \
            + row(wa_ref, vec + VEC_B2)                              # (B, D)
        x = ln_norm(ff + resid)
        if l != NUM_LAYERS - 1:
            # last layer's affine is folded into the output head host-side
            x = row(wa_ref, vec + VEC_G2) * x + row(wa_ref, vec + VEC_BE2)

    # ---- final Linear(d_model, 1): VPU mul + lane reduce (no N=1 MXU matmul) ----
    w_row = row(wa_ref, HEAD_OFF)        # g2_last ⊙ wout      (1, D)
    b_row = row(wa_ref, HEAD_OFF + 1)    # [be2_last@wout+bout, 0, ...] (1, D)
    out_ref[...] = jnp.sum(x * w_row + b_row, axis=-1, keepdims=True)


def run_transformer(feat, slab_a, slab_b, y=None, encoder_self_attention_mask=None):
    """feat is the pre-concatenated (B, 18) feature table (built in numpy).
    y and mask mirror Transformer.forward(x, y, mask=None); both unused."""
    del y, encoder_self_attention_mask
    B = feat.shape[0]
    out = pl.pallas_call(
        transformer_kernel,
        out_shape=jax.ShapeDtypeStruct((B, 1), jnp.float32),
    )(feat, slab_a, slab_b)
    # PyTorch returns (batch, seq_len=1, 1)
    return out.reshape(B, 1, 1)


# ------------------------- parameter initialization -------------------------
def init_torch_params(key):
    """Deterministic params in PyTorch layout: Linear weight (out, in), bias (out,)."""
    n_linears = 3 + NUM_LAYERS * 4 + 1
    keys = jax.random.split(key, n_linears * 2)
    ki = iter(keys)

    def lin(out_dim, in_dim):
        w = 0.05 * jax.random.normal(next(ki), (out_dim, in_dim), jnp.float32)
        b = 0.05 * jax.random.normal(next(ki), (out_dim,), jnp.float32)
        return (w, b)

    tp = {'pos': lin(D_MODEL, 3), 'time': lin(D_MODEL, 8),
          'num': lin(D_MODEL, 7), 'layers': []}
    for _ in range(NUM_LAYERS):
        tp['layers'].append({
            'qkv': lin(3 * D_MODEL, D_MODEL),
            'o': lin(D_MODEL, D_MODEL),
            'g1': jnp.ones((D_MODEL,), jnp.float32),
            'be1': jnp.zeros((D_MODEL,), jnp.float32),
            'ffn1': lin(FFN_HIDDEN, D_MODEL),
            'ffn2': lin(D_MODEL, FFN_HIDDEN),
            'g2': jnp.ones((D_MODEL,), jnp.float32),
            'be2': jnp.zeros((D_MODEL,), jnp.float32),
        })
    tp['out'] = lin(1, D_MODEL)
    return tp


def build_packed_params(tp):
    """Pack all torch-layout params into two lane-contiguous f32 slabs.

    Folds (in float64, exact at these sizes):
      * the three encoder linears into one (18, D) matmul + pre-summed bias,
      * the seq_len==1 attention block into one (D, D) matmul per layer
        (softmax == 1, values == v;  W_attn = Wv_eff @ Wo^T),
      * the last layer's LayerNorm affine into the output head:
        w_head = g2_last ⊙ wout,  b_head = be2_last @ wout + bout.
    """
    hd = HEAD_DIM
    v_cols = np.concatenate([np.arange(h * 3 * hd + 2 * hd, h * 3 * hd + 3 * hd)
                             for h in range(NUM_HEADS)])

    def f64(a):
        return np.asarray(a, np.float64)

    slab_a = np.zeros((A_ROWS, D_MODEL), np.float64)
    slab_b = np.zeros((B_ROWS, FFN_HIDDEN), np.float64)

    # fused spatiotemporal encoder
    wp, bp = tp['pos']
    wt, bt = tp['time']
    wn, bn = tp['num']
    slab_a[ENC_W_OFF:ENC_W_OFF + N_FEAT, :] = np.concatenate(
        [f64(wp).T, f64(wt).T, f64(wn).T], axis=0)                 # (18, D)
    slab_a[ENC_B_OFF, :] = f64(bp) + f64(bt) + f64(bn)

    for l, lp in enumerate(tp['layers']):
        wq, bq = lp['qkv']
        wo, bo = lp['o']
        wv_eff = f64(wq)[v_cols].T                 # (D, D) value projection (in, out)
        bv_eff = f64(bq)[v_cols]                   # (D,)
        w_attn = wv_eff @ f64(wo).T                # (D, D)
        b_attn = bv_eff @ f64(wo).T + f64(bo)      # (D,)

        a0 = LAYER0_OFF + l * LAYER_STRIDE_A
        slab_a[a0:a0 + D_MODEL, :] = w_attn
        slab_a[a0 + D_MODEL:a0 + D_MODEL + FFN_HIDDEN, :] = f64(lp['ffn2'][0]).T
        vec = a0 + D_MODEL + FFN_HIDDEN
        slab_a[vec + VEC_BATTN, :] = b_attn
        slab_a[vec + VEC_G1, :] = f64(lp['g1'])
        slab_a[vec + VEC_BE1, :] = f64(lp['be1'])
        slab_a[vec + VEC_B2, :] = f64(lp['ffn2'][1])
        slab_a[vec + VEC_G2, :] = f64(lp['g2'])
        slab_a[vec + VEC_BE2, :] = f64(lp['be2'])

        b0 = l * LAYER_STRIDE_B
        slab_b[b0:b0 + D_MODEL, :] = f64(lp['ffn1'][0]).T          # (D, H)
        slab_b[b0 + D_MODEL, :] = f64(lp['ffn1'][1])

    # output head with last LN affine folded in
    wout, bout = tp['out']
    wout_row = f64(wout)[0]                                        # (D,)
    g2_last = f64(tp['layers'][-1]['g2'])
    be2_last = f64(tp['layers'][-1]['be2'])
    slab_a[HEAD_OFF, :] = g2_last * wout_row
    slab_a[HEAD_OFF + 1, 0] = float(be2_last @ wout_row + f64(bout)[0])

    return (jnp.asarray(slab_a, jnp.float32), jnp.asarray(slab_b, jnp.float32))


# ------------------------- glue: DataFrame feature encoding -----------------
def encode_coordinates(latitude, longitude):
    lat_r = np.radians(latitude)
    lon_r = np.radians(longitude)
    return (np.cos(lat_r) * np.cos(lon_r),
            np.cos(lat_r) * np.sin(lon_r),
            np.sin(lat_r))


def encode_time(month, day, hour, year, am_pm):
    return (np.sin(2 * np.pi * month / 12), np.cos(2 * np.pi * month / 12),
            np.sin(2 * np.pi * day / 31), np.cos(2 * np.pi * day / 31),
            np.sin(2 * np.pi * hour / 24), np.cos(2 * np.pi * hour / 24),
            year.astype(float), am_pm.astype(float))


# ------------------------------ pure-JAX reference ---------------------------
def ref_forward(pos, tim, num, tp):
    """Faithful (un-folded) reference matching the PyTorch module."""
    def linear(x, wb):
        w, b = wb
        return x @ w.T + b

    def ln(x, gamma, beta):
        mean = x.mean(-1, keepdims=True)
        var = ((x - mean) ** 2).mean(-1, keepdims=True)
        return gamma * ((x - mean) / jnp.sqrt(var + EPS)) + beta

    B = pos.shape[0]
    emb = linear(pos, tp['pos']) + linear(tim, tp['time']) + linear(num, tp['num'])
    x = emb.reshape(B, 1, D_MODEL)
    for lp in tp['layers']:
        resid = x
        qkv = linear(x, lp['qkv'])                                  # (B,1,3D)
        qkv = qkv.reshape(B, 1, NUM_HEADS, 3 * HEAD_DIM).transpose(0, 2, 1, 3)
        q = qkv[..., :HEAD_DIM]
        k = qkv[..., HEAD_DIM:2 * HEAD_DIM]
        v = qkv[..., 2 * HEAD_DIM:]
        scaled = jnp.einsum('bhqd,bhkd->bhqk', q, k) / math.sqrt(HEAD_DIM)
        attn = jax.nn.softmax(scaled, axis=-1)
        values = jnp.einsum('bhqk,bhkd->bhqd', attn, v)
        values = values.transpose(0, 2, 1, 3).reshape(B, 1, D_MODEL)
        x = ln(linear(values, lp['o']) + resid, lp['g1'], lp['be1'])
        resid = x
        h = jax.nn.relu(linear(x, lp['ffn1']))
        x = ln(linear(h, lp['ffn2']) + resid, lp['g2'], lp['be2'])
    return linear(x, tp['out'])                                     # (B,1,1)


# ----------------------------------- main ------------------------------------
if __name__ == "__main__":
    key = jax.random.PRNGKey(0)
    dkeys = jax.random.split(key, 11)

    # raw "DataFrame columns"
    lat = np.asarray(jax.random.uniform(dkeys[0], (BATCH,), minval=-90., maxval=90.))
    lon = np.asarray(jax.random.uniform(dkeys[1], (BATCH,), minval=-180., maxval=180.))
    month = np.asarray(jax.random.randint(dkeys[2], (BATCH,), 1, 13))
    day = np.asarray(jax.random.randint(dkeys[3], (BATCH,), 1, 32))
    hour = np.asarray(jax.random.randint(dkeys[4], (BATCH,), 0, 24))
    year = np.asarray(jax.random.randint(dkeys[5], (BATCH,), 2020, 2023))
    am_pm = np.asarray(jax.random.randint(dkeys[6], (BATCH,), 0, 2))
    numerical = np.asarray(jax.random.normal(dkeys[7], (BATCH, 7)))
    y_dummy = np.asarray(jax.random.normal(dkeys[8], (BATCH, 1)))   # unused by forward

    cx, cy, cz = encode_coordinates(lat, lon)
    tfeat = encode_time(month, day, hour, year, am_pm)
    pos_np = np.stack([cx, cy, cz], axis=-1).astype(np.float32)     # (B, 3)
    time_np = np.stack(tfeat, axis=-1).astype(np.float32)           # (B, 8)
    num_np = numerical.astype(np.float32)                           # (B, 7)

    # feature concat happens in numpy (no per-call XLA concat in front of the kernel)
    feat_np = np.concatenate([pos_np, time_np, num_np], axis=-1)    # (B, 18)
    feat = jnp.asarray(feat_np, jnp.float32)

    torch_params = init_torch_params(dkeys[9])
    slab_a, slab_b = build_packed_params(torch_params)

    out = run_transformer(feat, slab_a, slab_b,
                          y=y_dummy, encoder_self_attention_mask=None)
    out = jax.block_until_ready(out)

    with jax.default_matmul_precision("highest"):
        ref = jax.block_until_ready(
            ref_forward(jnp.asarray(pos_np), jnp.asarray(time_np),
                        jnp.asarray(num_np), torch_params))

    np.testing.assert_allclose(np.asarray(out), np.asarray(ref),
                               rtol=1e-3, atol=1e-3)
    print("KERNEL_OK")
</pallas_src>

<mosaic_0001>
module attributes {stable_mosaic.version = 11 : i64} {
  func.func @transformer_kernel(%arg0: memref<16x18xf32, #tpu.memory_space<vmem>>, %arg1: memref<240x32xf32, #tpu.memory_space<vmem>>, %arg2: memref<80x64xf32, #tpu.memory_space<vmem>>, %arg3: memref<16x1xf32, #tpu.memory_space<vmem>>) attributes {dimension_semantics = [], scalar_prefetch = 0 : i64, scratch_operands = 0 : i64, tpu.core_type = #tpu.core_type<tc>} {
    %c0 = arith.constant 0 : index
    %c0_0 = arith.constant 0 : index
    %0 = vector.load %arg0[%c0, %c0_0] : memref<16x18xf32, #tpu.memory_space<vmem>>, vector<16x18xf32>
    %c0_1 = arith.constant 0 : index
    %c0_2 = arith.constant 0 : index
    %1 = vector.load %arg1[%c0_1, %c0_2] : memref<240x32xf32, #tpu.memory_space<vmem>>, vector<18x32xf32>
    %cst = arith.constant dense<0.000000e+00> : vector<16x32xf32>
    %2 = tpu.matmul %0, %1, %cst {dimension_numbers = #tpu.dot_dimension_numbers<[1], [0], [0], [1], [0, 0, 1, 1], [], []>} : vector<16x18xf32>, vector<18x32xf32>, vector<16x32xf32> -> vector<16x32xf32>
    %c18 = arith.constant 18 : index
    %c0_3 = arith.constant 0 : index
    %3 = vector.load %arg1[%c18, %c0_3] : memref<240x32xf32, #tpu.memory_space<vmem>>, vector<1x32xf32>
    %4 = vector.broadcast %3 : vector<1x32xf32> to vector<16x32xf32>
    %5 = arith.addf %2, %4 : vector<16x32xf32>
    %c24 = arith.constant 24 : index
    %c0_4 = arith.constant 0 : index
    %6 = vector.load %arg1[%c24, %c0_4] : memref<240x32xf32, #tpu.memory_space<vmem>>, vector<32x32xf32>
    %cst_5 = arith.constant dense<0.000000e+00> : vector<16x32xf32>
    %7 = tpu.matmul %5, %6, %cst_5 {dimension_numbers = #tpu.dot_dimension_numbers<[1], [0], [0], [1], [0, 0, 1, 1], [], []>} : vector<16x32xf32>, vector<32x32xf32>, vector<16x32xf32> -> vector<16x32xf32>
    %c120 = arith.constant 120 : index
    %c0_6 = arith.constant 0 : index
    %8 = vector.load %arg1[%c120, %c0_6] : memref<240x32xf32, #tpu.memory_space<vmem>>, vector<1x32xf32>
    %9 = vector.broadcast %8 : vector<1x32xf32> to vector<16x32xf32>
    %10 = arith.addf %7, %9 : vector<16x32xf32>
    %c121 = arith.constant 121 : index
    %c0_7 = arith.constant 0 : index
    %11 = vector.load %arg1[%c121, %c0_7] : memref<240x32xf32, #tpu.memory_space<vmem>>, vector<1x32xf32>
    %12 = arith.addf %10, %5 : vector<16x32xf32>
    %cst_8 = arith.constant dense<0.000000e+00> : vector<16xf32>
    %13 = vector.multi_reduction <add>, %12, %cst_8 [1] : vector<16x32xf32> to vector<16xf32>
    %14 = vector.shape_cast %13 : vector<16xf32> to vector<16x1xf32>
    %cst_9 = arith.constant 3.200000e+01 : f32
    %15 = vector.broadcast %cst_9 : f32 to vector<16x1xf32>
    %16 = arith.divf %14, %15 : vector<16x1xf32>
    %17 = arith.mulf %12, %12 : vector<16x32xf32>
    %cst_10 = arith.constant dense<0.000000e+00> : vector<16xf32>
    %18 = vector.multi_reduction <add>, %17, %cst_10 [1] : vector<16x32xf32> to vector<16xf32>
    %19 = vector.shape_cast %18 : vector<16xf32> to vector<16x1xf32>
    %cst_11 = arith.constant 3.200000e+01 : f32
    %20 = vector.broadcast %cst_11 : f32 to vector<16x1xf32>
    %21 = arith.divf %19, %20 : vector<16x1xf32>
    %22 = arith.mulf %16, %16 : vector<16x1xf32>
    %23 = arith.subf %21, %22 : vector<16x1xf32>
    %24 = vector.broadcast %16 : vector<16x1xf32> to vector<16x32xf32>
    %25 = arith.subf %12, %24 : vector<16x32xf32>
    %cst_12 = arith.constant 9.99999974E-6 : f32
    %26 = vector.broadcast %cst_12 : f32 to vector<16x1xf32>
    %27 = arith.addf %23, %26 : vector<16x1xf32>
    %28 = math.rsqrt %27 : vector<16x1xf32>
    %29 = vector.broadcast %28 : vector<16x1xf32> to vector<16x32xf32>
    %30 = arith.mulf %25, %29 : vector<16x32xf32>
    %31 = vector.broadcast %11 : vector<1x32xf32> to vector<16x32xf32>
    %32 = arith.mulf %31, %30 : vector<16x32xf32>
    %c122 = arith.constant 122 : index
    %c0_13 = arith.constant 0 : index
    %33 = vector.load %arg1[%c122, %c0_13] : memref<240x32xf32, #tpu.memory_space<vmem>>, vector<1x32xf32>
    %34 = vector.broadcast %33 : vector<1x32xf32> to vector<16x32xf32>
    %35 = arith.addf %32, %34 : vector<16x32xf32>
    %c0_14 = arith.constant 0 : index
    %c0_15 = arith.constant 0 : index
    %36 = vector.load %arg2[%c0_14, %c0_15] : memref<80x64xf32, #tpu.memory_space<vmem>>, vector<32x64xf32>
    %cst_16 = arith.constant dense<0.000000e+00> : vector<16x64xf32>
    %37 = tpu.matmul %35, %36, %cst_16 {dimension_numbers = #tpu.dot_dimension_numbers<[1], [0], [0], [1], [0, 0, 1, 1], [], []>} : vector<16x32xf32>, vector<32x64xf32>, vector<16x64xf32> -> vector<16x64xf32>
    %c32 = arith.constant 32 : index
    %c0_17 = arith.constant 0 : index
    %38 = vector.load %arg2[%c32, %c0_17] : memref<80x64xf32, #tpu.memory_space<vmem>>, vector<1x64xf32>
    %39 = vector.broadcast %38 : vector<1x64xf32> to vector<16x64xf32>
    %40 = arith.addf %37, %39 : vector<16x64xf32>
    %cst_18 = arith.constant 0.000000e+00 : f32
    %41 = vector.broadcast %cst_18 : f32 to vector<16x64xf32>
    %42 = arith.maximumf %40, %41 : vector<16x64xf32>
    %c56 = arith.constant 56 : index
    %c0_19 = arith.constant 0 : index
    %43 = vector.load %arg1[%c56, %c0_19] : memref<240x32xf32, #tpu.memory_space<vmem>>, vector<64x32xf32>
    %cst_20 = arith.constant dense<0.000000e+00> : vector<16x32xf32>
    %44 = tpu.matmul %42, %43, %cst_20 {dimension_numbers = #tpu.dot_dimension_numbers<[1], [0], [0], [1], [0, 0, 1, 1], [], []>} : vector<16x64xf32>, vector<64x32xf32>, vector<16x32xf32> -> vector<16x32xf32>
    %c123 = arith.constant 123 : index
    %c0_21 = arith.constant 0 : index
    %45 = vector.load %arg1[%c123, %c0_21] : memref<240x32xf32, #tpu.memory_space<vmem>>, vector<1x32xf32>
    %46 = vector.broadcast %45 : vector<1x32xf32> to vector<16x32xf32>
    %47 = arith.addf %44, %46 : vector<16x32xf32>
    %48 = arith.addf %47, %35 : vector<16x32xf32>
    %cst_22 = arith.constant dense<0.000000e+00> : vector<16xf32>
    %49 = vector.multi_reduction <add>, %48, %cst_22 [1] : vector<16x32xf32> to vector<16xf32>
    %50 = vector.shape_cast %49 : vector<16xf32> to vector<16x1xf32>
    %cst_23 = arith.constant 3.200000e+01 : f32
    %51 = vector.broadcast %cst_23 : f32 to vector<16x1xf32>
    %52 = arith.divf %50, %51 : vector<16x1xf32>
    %53 = arith.mulf %48, %48 : vector<16x32xf32>
    %cst_24 = arith.constant dense<0.000000e+00> : vector<16xf32>
    %54 = vector.multi_reduction <add>, %53, %cst_24 [1] : vector<16x32xf32> to vector<16xf32>
    %55 = vector.shape_cast %54 : vector<16xf32> to vector<16x1xf32>
    %cst_25 = arith.constant 3.200000e+01 : f32
    %56 = vector.broadcast %cst_25 : f32 to vector<16x1xf32>
    %57 = arith.divf %55, %56 : vector<16x1xf32>
    %58 = arith.mulf %52, %52 : vector<16x1xf32>
    %59 = arith.subf %57, %58 : vector<16x1xf32>
    %60 = vector.broadcast %52 : vector<16x1xf32> to vector<16x32xf32>
    %61 = arith.subf %48, %60 : vector<16x32xf32>
    %cst_26 = arith.constant 9.99999974E-6 : f32
    %62 = vector.broadcast %cst_26 : f32 to vector<16x1xf32>
    %63 = arith.addf %59, %62 : vector<16x1xf32>
    %64 = math.rsqrt %63 : vector<16x1xf32>
    %65 = vector.broadcast %64 : vector<16x1xf32> to vector<16x32xf32>
    %66 = arith.mulf %61, %65 : vector<16x32xf32>
    %c124 = arith.constant 124 : index
    %c0_27 = arith.constant 0 : index
    %67 = vector.load %arg1[%c124, %c0_27] : memref<240x32xf32, #tpu.memory_space<vmem>>, vector<1x32xf32>
    %68 = vector.broadcast %67 : vector<1x32xf32> to vector<16x32xf32>
    %69 = arith.mulf %68, %66 : vector<16x32xf32>
    %c125 = arith.constant 125 : index
    %c0_28 = arith.constant 0 : index
    %70 = vector.load %arg1[%c125, %c0_28] : memref<240x32xf32, #tpu.memory_space<vmem>>, vector<1x32xf32>
    %71 = vector.broadcast %70 : vector<1x32xf32> to vector<16x32xf32>
    %72 = arith.addf %69, %71 : vector<16x32xf32>
    %c128 = arith.constant 128 : index
    %c0_29 = arith.constant 0 : index
    %73 = vector.load %arg1[%c128, %c0_29] : memref<240x32xf32, #tpu.memory_space<vmem>>, vector<32x32xf32>
    %cst_30 = arith.constant dense<0.000000e+00> : vector<16x32xf32>
    %74 = tpu.matmul %72, %73, %cst_30 {dimension_numbers = #tpu.dot_dimension_numbers<[1], [0], [0], [1], [0, 0, 1, 1], [], []>} : vector<16x32xf32>, vector<32x32xf32>, vector<16x32xf32> -> vector<16x32xf32>
    %c224 = arith.constant 224 : index
    %c0_31 = arith.constant 0 : index
    %75 = vector.load %arg1[%c224, %c0_31] : memref<240x32xf32, #tpu.memory_space<vmem>>, vector<1x32xf32>
    %76 = vector.broadcast %75 : vector<1x32xf32> to vector<16x32xf32>
    %77 = arith.addf %74, %76 : vector<16x32xf32>
    %c225 = arith.constant 225 : index
    %c0_32 = arith.constant 0 : index
    %78 = vector.load %arg1[%c225, %c0_32] : memref<240x32xf32, #tpu.memory_space<vmem>>, vector<1x32xf32>
    %79 = arith.addf %77, %72 : vector<16x32xf32>
    %cst_33 = arith.constant dense<0.000000e+00> : vector<16xf32>
    %80 = vector.multi_reduction <add>, %79, %cst_33 [1] : vector<16x32xf32> to vector<16xf32>
    %81 = vector.shape_cast %80 : vector<16xf32> to vector<16x1xf32>
    %cst_34 = arith.constant 3.200000e+01 : f32
    %82 = vector.broadcast %cst_34 : f32 to vector<16x1xf32>
    %83 = arith.divf %81, %82 : vector<16x1xf32>
    %84 = arith.mulf %79, %79 : vector<16x32xf32>
    %cst_35 = arith.constant dense<0.000000e+00> : vector<16xf32>
    %85 = vector.multi_reduction <add>, %84, %cst_35 [1] : vector<16x32xf32> to vector<16xf32>
    %86 = vector.shape_cast %85 : vector<16xf32> to vector<16x1xf32>
    %cst_36 = arith.constant 3.200000e+01 : f32
    %87 = vector.broadcast %cst_36 : f32 to vector<16x1xf32>
    %88 = arith.divf %86, %87 : vector<16x1xf32>
    %89 = arith.mulf %83, %83 : vector<16x1xf32>
    %90 = arith.subf %88, %89 : vector<16x1xf32>
    %91 = vector.broadcast %83 : vector<16x1xf32> to vector<16x32xf32>
    %92 = arith.subf %79, %91 : vector<16x32xf32>
    %cst_37 = arith.constant 9.99999974E-6 : f32
    %93 = vector.broadcast %cst_37 : f32 to vector<16x1xf32>
    %94 = arith.addf %90, %93 : vector<16x1xf32>
    %95 = math.rsqrt %94 : vector<16x1xf32>
    %96 = vector.broadcast %95 : vector<16x1xf32> to vector<16x32xf32>
    %97 = arith.mulf %92, %96 : vector<16x32xf32>
    %98 = vector.broadcast %78 : vector<1x32xf32> to vector<16x32xf32>
    %99 = arith.mulf %98, %97 : vector<16x32xf32>
    %c226 = arith.constant 226 : index
    %c0_38 = arith.constant 0 : index
    %100 = vector.load %arg1[%c226, %c0_38] : memref<240x32xf32, #tpu.memory_space<vmem>>, vector<1x32xf32>
    %101 = vector.broadcast %100 : vector<1x32xf32> to vector<16x32xf32>
    %102 = arith.addf %99, %101 : vector<16x32xf32>
    %c40 = arith.constant 40 : index
    %c0_39 = arith.constant 0 : index
    %103 = vector.load %arg2[%c40, %c0_39] : memref<80x64xf32, #tpu.memory_space<vmem>>, vector<32x64xf32>
    %cst_40 = arith.constant dense<0.000000e+00> : vector<16x64xf32>
    %104 = tpu.matmul %102, %103, %cst_40 {dimension_numbers = #tpu.dot_dimension_numbers<[1], [0], [0], [1], [0, 0, 1, 1], [], []>} : vector<16x32xf32>, vector<32x64xf32>, vector<16x64xf32> -> vector<16x64xf32>
    %c72 = arith.constant 72 : index
    %c0_41 = arith.constant 0 : index
    %105 = vector.load %arg2[%c72, %c0_41] : memref<80x64xf32, #tpu.memory_space<vmem>>, vector<1x64xf32>
    %106 = vector.broadcast %105 : vector<1x64xf32> to vector<16x64xf32>
    %107 = arith.addf %104, %106 : vector<16x64xf32>
    %cst_42 = arith.constant 0.000000e+00 : f32
    %108 = vector.broadcast %cst_42 : f32 to vector<16x64xf32>
    %109 = arith.maximumf %107, %108 : vector<16x64xf32>
    %c160 = arith.constant 160 : index
    %c0_43 = arith.constant 0 : index
    %110 = vector.load %arg1[%c160, %c0_43] : memref<240x32xf32, #tpu.memory_space<vmem>>, vector<64x32xf32>
    %cst_44 = arith.constant dense<0.000000e+00> : vector<16x32xf32>
    %111 = tpu.matmul %109, %110, %cst_44 {dimension_numbers = #tpu.dot_dimension_numbers<[1], [0], [0], [1], [0, 0, 1, 1], [], []>} : vector<16x64xf32>, vector<64x32xf32>, vector<16x32xf32> -> vector<16x32xf32>
    %c227 = arith.constant 227 : index
    %c0_45 = arith.constant 0 : index
    %112 = vector.load %arg1[%c227, %c0_45] : memref<240x32xf32, #tpu.memory_space<vmem>>, vector<1x32xf32>
    %113 = vector.broadcast %112 : vector<1x32xf32> to vector<16x32xf32>
    %114 = arith.addf %111, %113 : vector<16x32xf32>
    %115 = arith.addf %114, %102 : vector<16x32xf32>
    %cst_46 = arith.constant dense<0.000000e+00> : vector<16xf32>
    %116 = vector.multi_reduction <add>, %115, %cst_46 [1] : vector<16x32xf32> to vector<16xf32>
    %117 = vector.shape_cast %116 : vector<16xf32> to vector<16x1xf32>
    %cst_47 = arith.constant 3.200000e+01 : f32
    %118 = vector.broadcast %cst_47 : f32 to vector<16x1xf32>
    %119 = arith.divf %117, %118 : vector<16x1xf32>
    %120 = arith.mulf %115, %115 : vector<16x32xf32>
    %cst_48 = arith.constant dense<0.000000e+00> : vector<16xf32>
    %121 = vector.multi_reduction <add>, %120, %cst_48 [1] : vector<16x32xf32> to vector<16xf32>
    %122 = vector.shape_cast %121 : vector<16xf32> to vector<16x1xf32>
    %cst_49 = arith.constant 3.200000e+01 : f32
    %123 = vector.broadcast %cst_49 : f32 to vector<16x1xf32>
    %124 = arith.divf %122, %123 : vector<16x1xf32>
    %125 = arith.mulf %119, %119 : vector<16x1xf32>
    %126 = arith.subf %124, %125 : vector<16x1xf32>
    %127 = vector.broadcast %119 : vector<16x1xf32> to vector<16x32xf32>
    %128 = arith.subf %115, %127 : vector<16x32xf32>
    %cst_50 = arith.constant 9.99999974E-6 : f32
    %129 = vector.broadcast %cst_50 : f32 to vector<16x1xf32>
    %130 = arith.addf %126, %129 : vector<16x1xf32>
    %131 = math.rsqrt %130 : vector<16x1xf32>
    %132 = vector.broadcast %131 : vector<16x1xf32> to vector<16x32xf32>
    %133 = arith.mulf %128, %132 : vector<16x32xf32>
    %c232 = arith.constant 232 : index
    %c0_51 = arith.constant 0 : index
    %134 = vector.load %arg1[%c232, %c0_51] : memref<240x32xf32, #tpu.memory_space<vmem>>, vector<1x32xf32>
    %c233 = arith.constant 233 : index
    %c0_52 = arith.constant 0 : index
    %135 = vector.load %arg1[%c233, %c0_52] : memref<240x32xf32, #tpu.memory_space<vmem>>, vector<1x32xf32>
    %136 = vector.broadcast %134 : vector<1x32xf32> to vector<16x32xf32>
    %137 = arith.mulf %133, %136 : vector<16x32xf32>
    %138 = vector.broadcast %135 : vector<1x32xf32> to vector<16x32xf32>
    %139 = arith.addf %137, %138 : vector<16x32xf32>
    %cst_53 = arith.constant dense<0.000000e+00> : vector<16xf32>
    %140 = vector.multi_reduction <add>, %139, %cst_53 [1] : vector<16x32xf32> to vector<16xf32>
    %141 = vector.shape_cast %140 : vector<16xf32> to vector<16x1xf32>
    %c0_54 = arith.constant 0 : index
    %c0_55 = arith.constant 0 : index
    %142 = vector.load %arg3[%c0_54, %c0_55] : memref<16x1xf32, #tpu.memory_space<vmem>>, vector<16x1xf32>
    tpu.vector_store %arg3[%c0_54, %c0_55], %141 {strides = array<i32>} : memref<16x1xf32, #tpu.memory_space<vmem>>, vector<16x1xf32>,
    return
  }
}

</mosaic_0001>

<llo_original>
// kernel: tpu_custom_call.1
$region0: #{tpu_custom_call.1}
  #allocation0 [shape = 'u32[]', space=smem, size = 0x4, offset = 0x4, fixed_abs, tag = 'smem constant byte address 0x4 - core index']
  #allocation1 [shape = 'u32[144,128]{1,0:T(1,128)}', space=vmem, size = 0x12000, scoped, tag = 'internal scratch']
  %s0 = inlined_call_operand.vmem [shape: f32[16,18], index: 0, kind: input, shape index: {}]
  %s1 = inlined_call_operand.vmem [shape: f32[240,32], index: 1, kind: input, shape index: {}]
  %s2 = inlined_call_operand.vmem [shape: f32[80,64], index: 2, kind: input, shape index: {}]
  %s3 = inlined_call_operand.vmem [shape: f32[16,1], index: 3, kind: output, shape index: {}]
  %s4 = sld [smem:[#allocation0]]
  $region22: #{tpu_custom_call.1} parent=0
    _
  %s6 = ssub.s32 1, %s4
  %s7 = scalar_select 0, %s6, %s4
  // Predicated region
  $region2: #{tpu_custom_call.1} parent=0 // pred_check
    _
  $region3: #{tpu_custom_call.1} parent=0 // pred_check_branch
    %9 = sbr.rel (0) target = $region5
  $region4: #{tpu_custom_call.1} parent=0 // pred_region
    _
  $region5: #{tpu_custom_call.1} parent=0 // pred_fallthru
    _
  // Predicated region
  $region6: #{tpu_custom_call.1} parent=0 // pred_check
    _
  $region7: #{tpu_custom_call.1} parent=0 // pred_check_branch
    %11 = sbr.rel (0) target = $region9
  $region8: #{tpu_custom_call.1} parent=0 // pred_region
    _
  $region9: #{tpu_custom_call.1} parent=0 // pred_fallthru
    _
  // Predicated region
  $region10: #{tpu_custom_call.1} parent=0 // pred_check
    _
  $region11: #{tpu_custom_call.1} parent=0 // pred_check_branch
    %13 = sbr.rel (0) target = $region13
  $region12: #{tpu_custom_call.1} parent=0 // pred_region
    _
  $region13: #{tpu_custom_call.1} parent=0 // pred_fallthru
    _
  %v14 = vld [vmem:[%s0] sm:$0xff]
  %v15 = vld [vmem:[%s0 + $0x8] sm:$0xff]
  %v16 = vld [vmem:[%s1] sm:$0xff]
  %v17 = vld [vmem:[%s1 + $0x8] sm:$0xff]
  %v18 = vld [vmem:[%s1 + $0x10] sm:$0x3]
  %v19 = vld [vmem:[%s1 + $0x12] sm:$0x1]
  %v20 = vlaneseq
  %v21 = vshrl.u32 %v20, 7
  %v22 = vsub.s32 0, %v21
  %v23 = vrot.slane %v19, %v22
  %vm24 = vcmask 146432
  %v26 = vsel %vm24, %v14, 0
  %v29 = vsel %vm24, %v15, 0
  %vm31 = vcmask 1041408
  %v33 = vsel %vm31, %v18, 0
  %35 = vmatprep.subr.mxu0 0.0
  %36 = vmatpush1.msra.mxu0 %v16
  %37 = vmatprep.subr.mxu0 0.0
  %38 = vmatpush1.msra.mxu0 %v17
  %39 = vmatprep.subr.mxu0 0.0
  %40 = vmatpush1.msra.mxu0 %v33
  %41 = vmatprep.subr.mxu0 0.0
  %42 = vmatpush1.msra.mxu0 0.0
  %43 = vmatprep.subr.mxu0 0.0
  %44 = vmatpush1.msra.mxu0 0.0
  %45 = vmatprep.subr.mxu0 0.0
  %46 = vmatpush1.msra.mxu0 0.0
  %47 = vmatprep.subr.mxu0 0.0
  %48 = vmatpush1.msra.mxu0 0.0
  %49 = vmatprep.subr.mxu0 0.0
  %50 = vmatpush1.msra.mxu0 0.0
  %51 = vmatprep.subr.mxu0 0.0
  %52 = vmatpush1.msra.mxu0 0.0
  %53 = vmatprep.subr.mxu0 0.0
  %54 = vmatpush1.msra.mxu0 0.0
  %55 = vmatprep.subr.mxu0 0.0
  %56 = vmatpush1.msra.mxu0 0.0
  %57 = vmatprep.subr.mxu0 0.0
  %58 = vmatpush1.msra.mxu0 0.0
  %59 = vmatprep.subr.mxu0 0.0
  %60 = vmatpush1.msra.mxu0 0.0
  %61 = vmatprep.subr.mxu0 0.0
  %62 = vmatpush1.msra.mxu0 0.0
  %63 = vmatprep.subr.mxu0 0.0
  %64 = vmatpush1.msra.mxu0 0.0
  %65 = vmatprep.subr.mxu0 0.0
  %66 = vmatpush1.msra.mxu0 0.0
  %67 = vmatprep.subr.mxu0 0.0
  %68 = vmatpush1.msra.mxu0 0.0
  %69 = vmatprep.subr.mxu0 0.0
  %70 = vmatpush1.msra.mxu0 0.0
  %71 = vmatprep.subr.mxu0 0.0
  %72 = vmatpush1.msra.mxu0 0.0
  %73 = vmatprep.subr.mxu0 0.0
  %74 = vmatpush1.msra.mxu0 0.0
  %75 = vmatprep.subr.mxu0 0.0
  %76 = vmatpush1.msra.mxu0 0.0
  %77 = vmatprep.subr.mxu0 0.0
  %78 = vmatpush1.msra.mxu0 0.0
  %79 = vmatprep.subr.mxu0 0.0
  %80 = vmatpush1.msra.mxu0 0.0
  %81 = vmatprep.subr.mxu0 0.0
  %82 = vmatpush1.msra.mxu0 0.0
  %83 = vmatprep.subr.mxu0 0.0
  %84 = vmatpush1.msra.mxu0 0.0
  %85 = vmatprep.subr.mxu0 0.0
  %86 = vmatpush1.msra.mxu0 0.0
  %87 = vmatprep.subr.mxu0 0.0
  %88 = vmatpush1.msra.mxu0 0.0
  %89 = vmatprep.subr.mxu0 0.0
  %90 = vmatpush1.msra.mxu0 0.0
  %91 = vmatprep.subr.mxu0 0.0
  %92 = vmatpush1.msra.mxu0 0.0
  %93 = vmatprep.subr.mxu0 0.0
  %94 = vmatpush1.msra.mxu0 0.0
  %95 = vmatprep.subr.mxu0 0.0
  %96 = vmatpush1.msra.mxu0 0.0
  %97 = vmatprep.subr.mxu0 0.0
  %98 = vmatpush1.msra.mxu0 0.0
  %99 = vmatprep.mubr.f32.mxu0 0.0
  %100 = vmatmul.mubr.f32.gmra.mrb[0].mxu0 %v26
  %v101 = vpop.f32.mrb[0].mxu0
  %v102 = vadd.f32 %v23, %v101
  %v103 = vpop.f32.mrb[0].mxu0
  %104 = vmatprep.mubr.f32.mxu0 0.0
  %105 = vmatmul.mubr.f32.gmra.mrb[0].mxu0 %v29
  %v106 = vpop.f32.mrb[0].mxu0
  %v107 = vadd.f32 %v23, %v106
  %v108 = vpop.f32.mrb[0].mxu0
  %109 = vdwg.mxu0
  %v110 = vld [vmem:[%s1 + $0x18] sm:$0xff]
  %v111 = vld [vmem:[%s1 + $0x20] sm:$0xff]
  %v112 = vld [vmem:[%s1 + $0x28] sm:$0xff]
  %v113 = vld [vmem:[%s1 + $0x30] sm:$0xff]
  %v114 = vld [vmem:[%s1 + $0x78] sm:$0x1]
  %v115 = vlaneseq
  %v116 = vshrl.u32 %v115, 7
  %v117 = vsub.s32 0, %v116
  %v118 = vrot.slane %v114, %v117
  %vm119 = vcmask 261120
  %v121 = vsel %vm119, %v102, 0
  %v124 = vsel %vm119, %v107, 0
  %126 = vmatprep.subr.mxu0 0.0
  %127 = vmatpush1.msra.mxu0 %v110
  %128 = vmatprep.subr.mxu0 0.0
  %129 = vmatpush1.msra.mxu0 %v111
  %130 = vmatprep.subr.mxu0 0.0
  %131 = vmatpush1.msra.mxu0 %v112
  %132 = vmatprep.subr.mxu0 0.0
  %133 = vmatpush1.msra.mxu0 %v113
  %134 = vmatprep.subr.mxu0 0.0
  %135 = vmatpush1.msra.mxu0 0.0
  %136 = vmatprep.subr.mxu0 0.0
  %137 = vmatpush1.msra.mxu0 0.0
  %138 = vmatprep.subr.mxu0 0.0
  %139 = vmatpush1.msra.mxu0 0.0
  %140 = vmatprep.subr.mxu0 0.0
  %141 = vmatpush1.msra.mxu0 0.0
  %142 = vmatprep.subr.mxu0 0.0
  %143 = vmatpush1.msra.mxu0 0.0
  %144 = vmatprep.subr.mxu0 0.0
  %145 = vmatpush1.msra.mxu0 0.0
  %146 = vmatprep.subr.mxu0 0.0
  %147 = vmatpush1.msra.mxu0 0.0
  %148 = vmatprep.subr.mxu0 0.0
  %149 = vmatpush1.msra.mxu0 0.0
  %150 = vmatprep.subr.mxu0 0.0
  %151 = vmatpush1.msra.mxu0 0.0
  %152 = vmatprep.subr.mxu0 0.0
  %153 = vmatpush1.msra.mxu0 0.0
  %154 = vmatprep.subr.mxu0 0.0
  %155 = vmatpush1.msra.mxu0 0.0
  %156 = vmatprep.subr.mxu0 0.0
  %157 = vmatpush1.msra.mxu0 0.0
  %158 = vmatprep.subr.mxu0 0.0
  %159 = vmatpush1.msra.mxu0 0.0
  %160 = vmatprep.subr.mxu0 0.0
  %161 = vmatpush1.msra.mxu0 0.0
  %162 = vmatprep.subr.mxu0 0.0
  %163 = vmatpush1.msra.mxu0 0.0
  %164 = vmatprep.subr.mxu0 0.0
  %165 = vmatpush1.msra.mxu0 0.0
  %166 = vmatprep.subr.mxu0 0.0
  %167 = vmatpush1.msra.mxu0 0.0
  %168 = vmatprep.subr.mxu0 0.0
  %169 = vmatpush1.msra.mxu0 0.0
  %170 = vmatprep.subr.mxu0 0.0
  %171 = vmatpush1.msra.mxu0 0.0
  %172 = vmatprep.subr.mxu0 0.0
  %173 = vmatpush1.msra.mxu0 0.0
  %174 = vmatprep.subr.mxu0 0.0
  %175 = vmatpush1.msra.mxu0 0.0
  %176 = vmatprep.subr.mxu0 0.0
  %177 = vmatpush1.msra.mxu0 0.0
  %178 = vmatprep.subr.mxu0 0.0
  %179 = vmatpush1.msra.mxu0 0.0
  %180 = vmatprep.subr.mxu0 0.0
  %181 = vmatpush1.msra.mxu0 0.0
  %182 = vmatprep.subr.mxu0 0.0
  %183 = vmatpush1.msra.mxu0 0.0
  %184 = vmatprep.subr.mxu0 0.0
  %185 = vmatpush1.msra.mxu0 0.0
  %186 = vmatprep.subr.mxu0 0.0
  %187 = vmatpush1.msra.mxu0 0.0
  %188 = vmatprep.subr.mxu0 0.0
  %189 = vmatpush1.msra.mxu0 0.0
  %190 = vmatprep.mubr.f32.mxu0 0.0
  %191 = vmatmul.mubr.f32.gmra.mrb[0].mxu0 %v121
  %v192 = vpop.f32.mrb[0].mxu0
  %v193 = vadd.f32 %v118, %v192
  %v194 = vpop.f32.mrb[0].mxu0
  %195 = vmatprep.mubr.f32.mxu0 0.0
  %196 = vmatmul.mubr.f32.gmra.mrb[0].mxu0 %v124
  %v197 = vpop.f32.mrb[0].mxu0
  %v198 = vadd.f32 %v118, %v197
  %v199 = vpop.f32.mrb[0].mxu0
  %200 = vdwg.mxu0
  %v201 = vld [vmem:[%s1 + $0x79] sm:$0x1]
  %v202 = vadd.f32 %v193, %v102
  %v203 = vadd.f32 %v198, %v107
  %v204 = vsel %vm119, %v202, 0.0
  %205 = vadd.xlane.f32.xlu0 %v204
  %v206 = vpop.xlane.xlu0 %205
  %v207 = vsel %vm119, %v203, 0.0
  %208 = vadd.xlane.f32.xlu0 %v207
  %v209 = vpop.xlane.xlu0 %208
  %v210 = vrcp.pop 32.0
  %v211 = vmul.f32 %v206, %v210
  %v212 = vmul.f32 %v209, %v210
  %v213 = vmul.f32 %v202, %v202
  %v214 = vmul.f32 %v203, %v203
  %v215 = vsel %vm119, %v213, 0.0
  %216 = vadd.xlane.f32.xlu0 %v215
  %v217 = vpop.xlane.xlu0 %216
  %v218 = vsel %vm119, %v214, 0.0
  %219 = vadd.xlane.f32.xlu0 %v218
  %v220 = vpop.xlane.xlu0 %219
  %v221 = vmul.f32 %v217, %v210
  %v222 = vmul.f32 %v220, %v210
  %v223 = vmul.f32 %v211, %v211
  %v224 = vmul.f32 %v212, %v212
  %v225 = vsub.f32 %v221, %v223
  %v226 = vsub.f32 %v222, %v224
  %v227 = vsub.f32 %v202, %v211
  %v228 = vsub.f32 %v203, %v212
  %v229 = vadd.f32 %v225, 1e-05
  %v230 = vadd.f32 %v226, 1e-05
  %v231 = vrsqrt.pop %v229
  %v232 = vrsqrt.pop %v230
  %v233 = vmul.f32 %v227, %v231
  %v234 = vmul.f32 %v228, %v232
  %v235 = vlaneseq
  %v236 = vshrl.u32 %v235, 7
  %v237 = vsub.s32 0, %v236
  %v238 = vrot.slane %v201, %v237
  %v239 = vmul.f32 %v238, %v233
  %v240 = vmul.f32 %v238, %v234
  %v241 = vld [vmem:[%s1 + $0x7a] sm:$0x1]
  %v242 = vlaneseq
  %v243 = vshrl.u32 %v242, 7
  %v244 = vsub.s32 0, %v243
  %v245 = vrot.slane %v241, %v244
  %v246 = vadd.f32 %v239, %v245
  %v247 = vadd.f32 %v240, %v245
  %v248 = vld [vmem:[%s2] sm:$0xff]
  %v249 = vld [vmem:[%s2 + $0x8] sm:$0xff]
  %v250 = vld [vmem:[%s2 + $0x10] sm:$0xff]
  %v251 = vld [vmem:[%s2 + $0x18] sm:$0xff]
  %v252 = vld [vmem:[%s2 + $0x20] sm:$0x1]
  %v253 = vlaneseq
  %v254 = vshrl.u32 %v253, 7
  %v255 = vsub.s32 0, %v254
  %v256 = vrot.slane %v252, %v255
  %v258 = vsel %vm119, %v246, 0
  %v261 = vsel %vm119, %v247, 0
  %263 = vmatprep.subr.mxu0 0.0
  %264 = vmatpush1.msra.mxu0 %v248
  %265 = vmatprep.subr.mxu0 0.0
  %266 = vmatpush1.msra.mxu0 %v249
  %267 = vmatprep.subr.mxu0 0.0
  %268 = vmatpush1.msra.mxu0 %v250
  %269 = vmatprep.subr.mxu0 0.0
  %270 = vmatpush1.msra.mxu0 %v251
  %271 = vmatprep.subr.mxu0 0.0
  %272 = vmatpush1.msra.mxu0 0.0
  %273 = vmatprep.subr.mxu0 0.0
  %274 = vmatpush1.msra.mxu0 0.0
  %275 = vmatprep.subr.mxu0 0.0
  %276 = vmatpush1.msra.mxu0 0.0
  %277 = vmatprep.subr.mxu0 0.0
  %278 = vmatpush1.msra.mxu0 0.0
  %279 = vmatprep.subr.mxu0 0.0
  %280 = vmatpush1.msra.mxu0 0.0
  %281 = vmatprep.subr.mxu0 0.0
  %282 = vmatpush1.msra.mxu0 0.0
  %283 = vmatprep.subr.mxu0 0.0
  %284 = vmatpush1.msra.mxu0 0.0
  %285 = vmatprep.subr.mxu0 0.0
  %286 = vmatpush1.msra.mxu0 0.0
  %287 = vmatprep.subr.mxu0 0.0
  %288 = vmatpush1.msra.mxu0 0.0
  %289 = vmatprep.subr.mxu0 0.0
  %290 = vmatpush1.msra.mxu0 0.0
  %291 = vmatprep.subr.mxu0 0.0
  %292 = vmatpush1.msra.mxu0 0.0
  %293 = vmatprep.subr.mxu0 0.0
  %294 = vmatpush1.msra.mxu0 0.0
  %295 = vmatprep.subr.mxu0 0.0
  %296 = vmatpush1.msra.mxu0 0.0
  %297 = vmatprep.subr.mxu0 0.0
  %298 = vmatpush1.msra.mxu0 0.0
  %299 = vmatprep.subr.mxu0 0.0
  %300 = vmatpush1.msra.mxu0 0.0
  %301 = vmatprep.subr.mxu0 0.0
  %302 = vmatpush1.msra.mxu0 0.0
  %303 = vmatprep.subr.mxu0 0.0
  %304 = vmatpush1.msra.mxu0 0.0
  %305 = vmatprep.subr.mxu0 0.0
  %306 = vmatpush1.msra.mxu0 0.0
  %307 = vmatprep.subr.mxu0 0.0
  %308 = vmatpush1.msra.mxu0 0.0
  %309 = vmatprep.subr.mxu0 0.0
  %310 = vmatpush1.msra.mxu0 0.0
  %311 = vmatprep.subr.mxu0 0.0
  %312 = vmatpush1.msra.mxu0 0.0
  %313 = vmatprep.subr.mxu0 0.0
  %314 = vmatpush1.msra.mxu0 0.0
  %315 = vmatprep.subr.mxu0 0.0
  %316 = vmatpush1.msra.mxu0 0.0
  %317 = vmatprep.subr.mxu0 0.0
  %318 = vmatpush1.msra.mxu0 0.0
  %319 = vmatprep.subr.mxu0 0.0
  %320 = vmatpush1.msra.mxu0 0.0
  %321 = vmatprep.subr.mxu0 0.0
  %322 = vmatpush1.msra.mxu0 0.0
  %323 = vmatprep.subr.mxu0 0.0
  %324 = vmatpush1.msra.mxu0 0.0
  %325 = vmatprep.subr.mxu0 0.0
  %326 = vmatpush1.msra.mxu0 0.0
  %327 = vmatprep.mubr.f32.mxu0 0.0
  %328 = vmatmul.mubr.f32.gmra.mrb[0].mxu0 %v258
  %v329 = vpop.f32.mrb[0].mxu0
  %v330 = vadd.f32 %v256, %v329
  %v331 = vpop.f32.mrb[0].mxu0
  %332 = vmatprep.mubr.f32.mxu0 0.0
  %333 = vmatmul.mubr.f32.gmra.mrb[0].mxu0 %v261
  %v334 = vpop.f32.mrb[0].mxu0
  %v335 = vadd.f32 %v256, %v334
  %v336 = vpop.f32.mrb[0].mxu0
  %337 = vdwg.mxu0
  %v338 = vmax.f32 %v330, 0.0
  %v339 = vmax.f32 %v335, 0.0
  %v340 = vld [vmem:[%s1 + $0x38] sm:$0xff]
  %v341 = vld [vmem:[%s1 + $0x40] sm:$0xff]
  %v342 = vld [vmem:[%s1 + $0x48] sm:$0xff]
  %v343 = vld [vmem:[%s1 + $0x50] sm:$0xff]
  %v344 = vld [vmem:[%s1 + $0x58] sm:$0xff]
  %v345 = vld [vmem:[%s1 + $0x60] sm:$0xff]
  %v346 = vld [vmem:[%s1 + $0x68] sm:$0xff]
  %v347 = vld [vmem:[%s1 + $0x70] sm:$0xff]
  %v348 = vld [vmem:[%s1 + $0x7b] sm:$0x1]
  %v349 = vlaneseq
  %v350 = vshrl.u32 %v349, 7
  %v351 = vsub.s32 0, %v350
  %v352 = vrot.slane %v348, %v351
  %vm353 = vcmask 523264
  %v355 = vsel %vm353, %v338, 0
  %v358 = vsel %vm353, %v339, 0
  %360 = vmatprep.subr.mxu0 0.0
  %361 = vmatpush1.msra.mxu0 %v340
  %362 = vmatprep.subr.mxu0 0.0
  %363 = vmatpush1.msra.mxu0 %v341
  %364 = vmatprep.subr.mxu0 0.0
  %365 = vmatpush1.msra.mxu0 %v342
  %366 = vmatprep.subr.mxu0 0.0
  %367 = vmatpush1.msra.mxu0 %v343
  %368 = vmatprep.subr.mxu0 0.0
  %369 = vmatpush1.msra.mxu0 %v344
  %370 = vmatprep.subr.mxu0 0.0
  %371 = vmatpush1.msra.mxu0 %v345
  %372 = vmatprep.subr.mxu0 0.0
  %373 = vmatpush1.msra.mxu0 %v346
  %374 = vmatprep.subr.mxu0 0.0
  %375 = vmatpush1.msra.mxu0 %v347
  %376 = vmatprep.subr.mxu0 0.0
  %377 = vmatpush1.msra.mxu0 0.0
  %378 = vmatprep.subr.mxu0 0.0
  %379 = vmatpush1.msra.mxu0 0.0
  %380 = vmatprep.subr.mxu0 0.0
  %381 = vmatpush1.msra.mxu0 0.0
  %382 = vmatprep.subr.mxu0 0.0
  %383 = vmatpush1.msra.mxu0 0.0
  %384 = vmatprep.subr.mxu0 0.0
  %385 = vmatpush1.msra.mxu0 0.0
  %386 = vmatprep.subr.mxu0 0.0
  %387 = vmatpush1.msra.mxu0 0.0
  %388 = vmatprep.subr.mxu0 0.0
  %389 = vmatpush1.msra.mxu0 0.0
  %390 = vmatprep.subr.mxu0 0.0
  %391 = vmatpush1.msra.mxu0 0.0
  %392 = vmatprep.subr.mxu0 0.0
  %393 = vmatpush1.msra.mxu0 0.0
  %394 = vmatprep.subr.mxu0 0.0
  %395 = vmatpush1.msra.mxu0 0.0
  %396 = vmatprep.subr.mxu0 0.0
  %397 = vmatpush1.msra.mxu0 0.0
  %398 = vmatprep.subr.mxu0 0.0
  %399 = vmatpush1.msra.mxu0 0.0
  %400 = vmatprep.subr.mxu0 0.0
  %401 = vmatpush1.msra.mxu0 0.0
  %402 = vmatprep.subr.mxu0 0.0
  %403 = vmatpush1.msra.mxu0 0.0
  %404 = vmatprep.subr.mxu0 0.0
  %405 = vmatpush1.msra.mxu0 0.0
  %406 = vmatprep.subr.mxu0 0.0
  %407 = vmatpush1.msra.mxu0 0.0
  %408 = vmatprep.subr.mxu0 0.0
  %409 = vmatpush1.msra.mxu0 0.0
  %410 = vmatprep.subr.mxu0 0.0
  %411 = vmatpush1.msra.mxu0 0.0
  %412 = vmatprep.subr.mxu0 0.0
  %413 = vmatpush1.msra.mxu0 0.0
  %414 = vmatprep.subr.mxu0 0.0
  %415 = vmatpush1.msra.mxu0 0.0
  %416 = vmatprep.subr.mxu0 0.0
  %417 = vmatpush1.msra.mxu0 0.0
  %418 = vmatprep.subr.mxu0 0.0
  %419 = vmatpush1.msra.mxu0 0.0
  %420 = vmatprep.subr.mxu0 0.0
  %421 = vmatpush1.msra.mxu0 0.0
  %422 = vmatprep.subr.mxu0 0.0
  %423 = vmatpush1.msra.mxu0 0.0
  %424 = vmatprep.mubr.f32.mxu0 0.0
  %425 = vmatmul.mubr.f32.gmra.mrb[0].mxu0 %v355
  %v426 = vpop.f32.mrb[0].mxu0
  %v427 = vadd.f32 %v352, %v426
  %v428 = vpop.f32.mrb[0].mxu0
  %429 = vmatprep.mubr.f32.mxu0 0.0
  %430 = vmatmul.mubr.f32.gmra.mrb[0].mxu0 %v358
  %v431 = vpop.f32.mrb[0].mxu0
  %v432 = vadd.f32 %v352, %v431
  %v433 = vpop.f32.mrb[0].mxu0
  %434 = vdwg.mxu0
  %v435 = vadd.f32 %v427, %v246
  %v436 = vadd.f32 %v432, %v247
  %v437 = vsel %vm119, %v435, 0.0
  %438 = vadd.xlane.f32.xlu0 %v437
  %v439 = vpop.xlane.xlu0 %438
  %v440 = vsel %vm119, %v436, 0.0
  %441 = vadd.xlane.f32.xlu0 %v440
  %v442 = vpop.xlane.xlu0 %441
  %v443 = vmul.f32 %v439, %v210
  %v444 = vmul.f32 %v442, %v210
  %v445 = vmul.f32 %v435, %v435
  %v446 = vmul.f32 %v436, %v436
  %v447 = vsel %vm119, %v445, 0.0
  %448 = vadd.xlane.f32.xlu0 %v447
  %v449 = vpop.xlane.xlu0 %448
  %v450 = vsel %vm119, %v446, 0.0
  %451 = vadd.xlane.f32.xlu0 %v450
  %v452 = vpop.xlane.xlu0 %451
  %v453 = vmul.f32 %v449, %v210
  %v454 = vmul.f32 %v452, %v210
  %v455 = vmul.f32 %v443, %v443
  %v456 = vmul.f32 %v444, %v444
  %v457 = vsub.f32 %v453, %v455
  %v458 = vsub.f32 %v454, %v456
  %v459 = vsub.f32 %v435, %v443
  %v460 = vsub.f32 %v436, %v444
  %v461 = vadd.f32 %v457, 1e-05
  %v462 = vadd.f32 %v458, 1e-05
  %v463 = vrsqrt.pop %v461
  %v464 = vrsqrt.pop %v462
  %v465 = vmul.f32 %v459, %v463
  %v466 = vmul.f32 %v460, %v464
  %v467 = vld [vmem:[%s1 + $0x7c] sm:$0x1]
  %v468 = vlaneseq
  %v469 = vshrl.u32 %v468, 7
  %v470 = vsub.s32 0, %v469
  %v471 = vrot.slane %v467, %v470
  %v472 = vmul.f32 %v471, %v465
  %v473 = vmul.f32 %v471, %v466
  %v474 = vld [vmem:[%s1 + $0x7d] sm:$0x1]
  %v475 = vlaneseq
  %v476 = vshrl.u32 %v475, 7
  %v477 = vsub.s32 0, %v476
  %v478 = vrot.slane %v474, %v477
  %v479 = vadd.f32 %v472, %v478
  %v480 = vadd.f32 %v473, %v478
  %v481 = vld [vmem:[%s1 + $0x80] sm:$0xff]
  %v482 = vld [vmem:[%s1 + $0x88] sm:$0xff]
  %v483 = vld [vmem:[%s1 + $0x90] sm:$0xff]
  %v484 = vld [vmem:[%s1 + $0x98] sm:$0xff]
  %v485 = vld [vmem:[%s1 + $0xe0] sm:$0x1]
  %v486 = vlaneseq
  %v487 = vshrl.u32 %v486, 7
  %v488 = vsub.s32 0, %v487
  %v489 = vrot.slane %v485, %v488
  %v491 = vsel %vm119, %v479, 0
  %v494 = vsel %vm119, %v480, 0
  %496 = vmatprep.subr.mxu0 0.0
  %497 = vmatpush1.msra.mxu0 %v481
  %498 = vmatprep.subr.mxu0 0.0
  %499 = vmatpush1.msra.mxu0 %v482
  %500 = vmatprep.subr.mxu0 0.0
  %501 = vmatpush1.msra.mxu0 %v483
  %502 = vmatprep.subr.mxu0 0.0
  %503 = vmatpush1.msra.mxu0 %v484
  %504 = vmatprep.subr.mxu0 0.0
  %505 = vmatpush1.msra.mxu0 0.0
  %506 = vmatprep.subr.mxu0 0.0
  %507 = vmatpush1.msra.mxu0 0.0
  %508 = vmatprep.subr.mxu0 0.0
  %509 = vmatpush1.msra.mxu0 0.0
  %510 = vmatprep.subr.mxu0 0.0
  %511 = vmatpush1.msra.mxu0 0.0
  %512 = vmatprep.subr.mxu0 0.0
  %513 = vmatpush1.msra.mxu0 0.0
  %514 = vmatprep.subr.mxu0 0.0
  %515 = vmatpush1.msra.mxu0 0.0
  %516 = vmatprep.subr.mxu0 0.0
  %517 = vmatpush1.msra.mxu0 0.0
  %518 = vmatprep.subr.mxu0 0.0
  %519 = vmatpush1.msra.mxu0 0.0
  %520 = vmatprep.subr.mxu0 0.0
  %521 = vmatpush1.msra.mxu0 0.0
  %522 = vmatprep.subr.mxu0 0.0
  %523 = vmatpush1.msra.mxu0 0.0
  %524 = vmatprep.subr.mxu0 0.0
  %525 = vmatpush1.msra.mxu0 0.0
  %526 = vmatprep.subr.mxu0 0.0
  %527 = vmatpush1.msra.mxu0 0.0
  %528 = vmatprep.subr.mxu0 0.0
  %529 = vmatpush1.msra.mxu0 0.0
  %530 = vmatprep.subr.mxu0 0.0
  %531 = vmatpush1.msra.mxu0 0.0
  %532 = vmatprep.subr.mxu0 0.0
  %533 = vmatpush1.msra.mxu0 0.0
  %534 = vmatprep.subr.mxu0 0.0
  %535 = vmatpush1.msra.mxu0 0.0
  %536 = vmatprep.subr.mxu0 0.0
  %537 = vmatpush1.msra.mxu0 0.0
  %538 = vmatprep.subr.mxu0 0.0
  %539 = vmatpush1.msra.mxu0 0.0
  %540 = vmatprep.subr.mxu0 0.0
  %541 = vmatpush1.msra.mxu0 0.0
  %542 = vmatprep.subr.mxu0 0.0
  %543 = vmatpush1.msra.mxu0 0.0
  %544 = vmatprep.subr.mxu0 0.0
  %545 = vmatpush1.msra.mxu0 0.0
  %546 = vmatprep.subr.mxu0 0.0
  %547 = vmatpush1.msra.mxu0 0.0
  %548 = vmatprep.subr.mxu0 0.0
  %549 = vmatpush1.msra.mxu0 0.0
  %550 = vmatprep.subr.mxu0 0.0
  %551 = vmatpush1.msra.mxu0 0.0
  %552 = vmatprep.subr.mxu0 0.0
  %553 = vmatpush1.msra.mxu0 0.0
  %554 = vmatprep.subr.mxu0 0.0
  %555 = vmatpush1.msra.mxu0 0.0
  %556 = vmatprep.subr.mxu0 0.0
  %557 = vmatpush1.msra.mxu0 0.0
  %558 = vmatprep.subr.mxu0 0.0
  %559 = vmatpush1.msra.mxu0 0.0
  %560 = vmatprep.mubr.f32.mxu0 0.0
  %561 = vmatmul.mubr.f32.gmra.mrb[0].mxu0 %v491
  %v562 = vpop.f32.mrb[0].mxu0
  %v563 = vadd.f32 %v489, %v562
  %v564 = vpop.f32.mrb[0].mxu0
  %565 = vmatprep.mubr.f32.mxu0 0.0
  %566 = vmatmul.mubr.f32.gmra.mrb[0].mxu0 %v494
  %v567 = vpop.f32.mrb[0].mxu0
  %v568 = vadd.f32 %v489, %v567
  %v569 = vpop.f32.mrb[0].mxu0
  %570 = vdwg.mxu0
  %v571 = vld [vmem:[%s1 + $0xe1] sm:$0x1]
  %v572 = vadd.f32 %v563, %v479
  %v573 = vadd.f32 %v568, %v480
  %v574 = vsel %vm119, %v572, 0.0
  %575 = vadd.xlane.f32.xlu0 %v574
  %v576 = vpop.xlane.xlu0 %575
  %v577 = vsel %vm119, %v573, 0.0
  %578 = vadd.xlane.f32.xlu0 %v577
  %v579 = vpop.xlane.xlu0 %578
  %v580 = vmul.f32 %v576, %v210
  %v581 = vmul.f32 %v579, %v210
  %v582 = vmul.f32 %v572, %v572
  %v583 = vmul.f32 %v573, %v573
  %v584 = vsel %vm119, %v582, 0.0
  %585 = vadd.xlane.f32.xlu0 %v584
  %v586 = vpop.xlane.xlu0 %585
  %v587 = vsel %vm119, %v583, 0.0
  %588 = vadd.xlane.f32.xlu0 %v587
  %v589 = vpop.xlane.xlu0 %588
  %v590 = vmul.f32 %v586, %v210
  %v591 = vmul.f32 %v589, %v210
  %v592 = vmul.f32 %v580, %v580
  %v593 = vmul.f32 %v581, %v581
  %v594 = vsub.f32 %v590, %v592
  %v595 = vsub.f32 %v591, %v593
  %v596 = vsub.f32 %v572, %v580
  %v597 = vsub.f32 %v573, %v581
  %v598 = vadd.f32 %v594, 1e-05
  %v599 = vadd.f32 %v595, 1e-05
  %v600 = vrsqrt.pop %v598
  %v601 = vrsqrt.pop %v599
  %v602 = vmul.f32 %v596, %v600
  %v603 = vmul.f32 %v597, %v601
  %v604 = vlaneseq
  %v605 = vshrl.u32 %v604, 7
  %v606 = vsub.s32 0, %v605
  %v607 = vrot.slane %v571, %v606
  %v608 = vmul.f32 %v607, %v602
  %v609 = vmul.f32 %v607, %v603
  %v610 = vld [vmem:[%s1 + $0xe2] sm:$0x1]
  %v611 = vlaneseq
  %v612 = vshrl.u32 %v611, 7
  %v613 = vsub.s32 0, %v612
  %v614 = vrot.slane %v610, %v613
  %v615 = vadd.f32 %v608, %v614
  %v616 = vadd.f32 %v609, %v614
  %v617 = vld [vmem:[%s2 + $0x28] sm:$0xff]
  %v618 = vld [vmem:[%s2 + $0x30] sm:$0xff]
  %v619 = vld [vmem:[%s2 + $0x38] sm:$0xff]
  %v620 = vld [vmem:[%s2 + $0x40] sm:$0xff]
  %v621 = vld [vmem:[%s2 + $0x48] sm:$0x1]
  %v622 = vlaneseq
  %v623 = vshrl.u32 %v622, 7
  %v624 = vsub.s32 0, %v623
  %v625 = vrot.slane %v621, %v624
  %v627 = vsel %vm119, %v615, 0
  %v630 = vsel %vm119, %v616, 0
  %632 = vmatprep.subr.mxu0 0.0
  %633 = vmatpush1.msra.mxu0 %v617
  %634 = vmatprep.subr.mxu0 0.0
  %635 = vmatpush1.msra.mxu0 %v618
  %636 = vmatprep.subr.mxu0 0.0
  %637 = vmatpush1.msra.mxu0 %v619
  %638 = vmatprep.subr.mxu0 0.0
  %639 = vmatpush1.msra.mxu0 %v620
  %640 = vmatprep.subr.mxu0 0.0
  %641 = vmatpush1.msra.mxu0 0.0
  %642 = vmatprep.subr.mxu0 0.0
  %643 = vmatpush1.msra.mxu0 0.0
  %644 = vmatprep.subr.mxu0 0.0
  %645 = vmatpush1.msra.mxu0 0.0
  %646 = vmatprep.subr.mxu0 0.0
  %647 = vmatpush1.msra.mxu0 0.0
  %648 = vmatprep.subr.mxu0 0.0
  %649 = vmatpush1.msra.mxu0 0.0
  %650 = vmatprep.subr.mxu0 0.0
  %651 = vmatpush1.msra.mxu0 0.0
  %652 = vmatprep.subr.mxu0 0.0
  %653 = vmatpush1.msra.mxu0 0.0
  %654 = vmatprep.subr.mxu0 0.0
  %655 = vmatpush1.msra.mxu0 0.0
  %656 = vmatprep.subr.mxu0 0.0
  %657 = vmatpush1.msra.mxu0 0.0
  %658 = vmatprep.subr.mxu0 0.0
  %659 = vmatpush1.msra.mxu0 0.0
  %660 = vmatprep.subr.mxu0 0.0
  %661 = vmatpush1.msra.mxu0 0.0
  %662 = vmatprep.subr.mxu0 0.0
  %663 = vmatpush1.msra.mxu0 0.0
  %664 = vmatprep.subr.mxu0 0.0
  %665 = vmatpush1.msra.mxu0 0.0
  %666 = vmatprep.subr.mxu0 0.0
  %667 = vmatpush1.msra.mxu0 0.0
  %668 = vmatprep.subr.mxu0 0.0
  %669 = vmatpush1.msra.mxu0 0.0
  %670 = vmatprep.subr.mxu0 0.0
  %671 = vmatpush1.msra.mxu0 0.0
  %672 = vmatprep.subr.mxu0 0.0
  %673 = vmatpush1.msra.mxu0 0.0
  %674 = vmatprep.subr.mxu0 0.0
  %675 = vmatpush1.msra.mxu0 0.0
  %676 = vmatprep.subr.mxu0 0.0
  %677 = vmatpush1.msra.mxu0 0.0
  %678 = vmatprep.subr.mxu0 0.0
  %679 = vmatpush1.msra.mxu0 0.0
  %680 = vmatprep.subr.mxu0 0.0
  %681 = vmatpush1.msra.mxu0 0.0
  %682 = vmatprep.subr.mxu0 0.0
  %683 = vmatpush1.msra.mxu0 0.0
  %684 = vmatprep.subr.mxu0 0.0
  %685 = vmatpush1.msra.mxu0 0.0
  %686 = vmatprep.subr.mxu0 0.0
  %687 = vmatpush1.msra.mxu0 0.0
  %688 = vmatprep.subr.mxu0 0.0
  %689 = vmatpush1.msra.mxu0 0.0
  %690 = vmatprep.subr.mxu0 0.0
  %691 = vmatpush1.msra.mxu0 0.0
  %692 = vmatprep.subr.mxu0 0.0
  %693 = vmatpush1.msra.mxu0 0.0
  %694 = vmatprep.subr.mxu0 0.0
  %695 = vmatpush1.msra.mxu0 0.0
  %696 = vmatprep.mubr.f32.mxu0 0.0
  %697 = vmatmul.mubr.f32.gmra.mrb[0].mxu0 %v627
  %v698 = vpop.f32.mrb[0].mxu0
  %v699 = vadd.f32 %v625, %v698
  %v700 = vpop.f32.mrb[0].mxu0
  %701 = vmatprep.mubr.f32.mxu0 0.0
  %702 = vmatmul.mubr.f32.gmra.mrb[0].mxu0 %v630
  %v703 = vpop.f32.mrb[0].mxu0
  %v704 = vadd.f32 %v625, %v703
  %v705 = vpop.f32.mrb[0].mxu0
  %706 = vdwg.mxu0
  %v707 = vmax.f32 %v699, 0.0
  %v708 = vmax.f32 %v704, 0.0
  %v709 = vld [vmem:[%s1 + $0xa0] sm:$0xff]
  %v710 = vld [vmem:[%s1 + $0xa8] sm:$0xff]
  %v711 = vld [vmem:[%s1 + $0xb0] sm:$0xff]
  %v712 = vld [vmem:[%s1 + $0xb8] sm:$0xff]
  %v713 = vld [vmem:[%s1 + $0xc0] sm:$0xff]
  %v714 = vld [vmem:[%s1 + $0xc8] sm:$0xff]
  %v715 = vld [vmem:[%s1 + $0xd0] sm:$0xff]
  %v716 = vld [vmem:[%s1 + $0xd8] sm:$0xff]
  %v717 = vld [vmem:[%s1 + $0xe3] sm:$0x1]
  %v718 = vlaneseq
  %v719 = vshrl.u32 %v718, 7
  %v720 = vsub.s32 0, %v719
  %v721 = vrot.slane %v717, %v720
  %v723 = vsel %vm353, %v707, 0
  %v726 = vsel %vm353, %v708, 0
  %728 = vmatprep.subr.mxu0 0.0
  %729 = vmatpush1.msra.mxu0 %v709
  %730 = vmatprep.subr.mxu0 0.0
  %731 = vmatpush1.msra.mxu0 %v710
  %732 = vmatprep.subr.mxu0 0.0
  %733 = vmatpush1.msra.mxu0 %v711
  %734 = vmatprep.subr.mxu0 0.0
  %735 = vmatpush1.msra.mxu0 %v712
  %736 = vmatprep.subr.mxu0 0.0
  %737 = vmatpush1.msra.mxu0 %v713
  %738 = vmatprep.subr.mxu0 0.0
  %739 = vmatpush1.msra.mxu0 %v714
  %740 = vmatprep.subr.mxu0 0.0
  %741 = vmatpush1.msra.mxu0 %v715
  %742 = vmatprep.subr.mxu0 0.0
  %743 = vmatpush1.msra.mxu0 %v716
  %744 = vmatprep.subr.mxu0 0.0
  %745 = vmatpush1.msra.mxu0 0.0
  %746 = vmatprep.subr.mxu0 0.0
  %747 = vmatpush1.msra.mxu0 0.0
  %748 = vmatprep.subr.mxu0 0.0
  %749 = vmatpush1.msra.mxu0 0.0
  %750 = vmatprep.subr.mxu0 0.0
  %751 = vmatpush1.msra.mxu0 0.0
  %752 = vmatprep.subr.mxu0 0.0
  %753 = vmatpush1.msra.mxu0 0.0
  %754 = vmatprep.subr.mxu0 0.0
  %755 = vmatpush1.msra.mxu0 0.0
  %756 = vmatprep.subr.mxu0 0.0
  %757 = vmatpush1.msra.mxu0 0.0
  %758 = vmatprep.subr.mxu0 0.0
  %759 = vmatpush1.msra.mxu0 0.0
  %760 = vmatprep.subr.mxu0 0.0
  %761 = vmatpush1.msra.mxu0 0.0
  %762 = vmatprep.subr.mxu0 0.0
  %763 = vmatpush1.msra.mxu0 0.0
  %764 = vmatprep.subr.mxu0 0.0
  %765 = vmatpush1.msra.mxu0 0.0
  %766 = vmatprep.subr.mxu0 0.0
  %767 = vmatpush1.msra.mxu0 0.0
  %768 = vmatprep.subr.mxu0 0.0
  %769 = vmatpush1.msra.mxu0 0.0
  %770 = vmatprep.subr.mxu0 0.0
  %771 = vmatpush1.msra.mxu0 0.0
  %772 = vmatprep.subr.mxu0 0.0
  %773 = vmatpush1.msra.mxu0 0.0
  %774 = vmatprep.subr.mxu0 0.0
  %775 = vmatpush1.msra.mxu0 0.0
  %776 = vmatprep.subr.mxu0 0.0
  %777 = vmatpush1.msra.mxu0 0.0
  %778 = vmatprep.subr.mxu0 0.0
  %779 = vmatpush1.msra.mxu0 0.0
  %780 = vmatprep.subr.mxu0 0.0
  %781 = vmatpush1.msra.mxu0 0.0
  %782 = vmatprep.subr.mxu0 0.0
  %783 = vmatpush1.msra.mxu0 0.0
  %784 = vmatprep.subr.mxu0 0.0
  %785 = vmatpush1.msra.mxu0 0.0
  %786 = vmatprep.subr.mxu0 0.0
  %787 = vmatpush1.msra.mxu0 0.0
  %788 = vmatprep.subr.mxu0 0.0
  %789 = vmatpush1.msra.mxu0 0.0
  %790 = vmatprep.subr.mxu0 0.0
  %791 = vmatpush1.msra.mxu0 0.0
  %792 = vmatprep.mubr.f32.mxu0 0.0
  %793 = vmatmul.mubr.f32.gmra.mrb[0].mxu0 %v723
  %v794 = vpop.f32.mrb[0].mxu0
  %v795 = vadd.f32 %v721, %v794
  %v796 = vpop.f32.mrb[0].mxu0
  %797 = vmatprep.mubr.f32.mxu0 0.0
  %798 = vmatmul.mubr.f32.gmra.mrb[0].mxu0 %v726
  %v799 = vpop.f32.mrb[0].mxu0
  %v800 = vadd.f32 %v721, %v799
  %v801 = vpop.f32.mrb[0].mxu0
  %802 = vdwg.mxu0
  %v803 = vadd.f32 %v795, %v615
  %v804 = vadd.f32 %v800, %v616
  %v805 = vsel %vm119, %v803, 0.0
  %806 = vadd.xlane.f32.xlu0 %v805
  %v807 = vpop.xlane.xlu0 %806
  %v808 = vsel %vm119, %v804, 0.0
  %809 = vadd.xlane.f32.xlu0 %v808
  %v810 = vpop.xlane.xlu0 %809
  %v811 = vmul.f32 %v807, %v210
  %v812 = vmul.f32 %v810, %v210
  %v813 = vmul.f32 %v803, %v803
  %v814 = vmul.f32 %v804, %v804
  %v815 = vsel %vm119, %v813, 0.0
  %816 = vadd.xlane.f32.xlu0 %v815
  %v817 = vpop.xlane.xlu0 %816
  %v818 = vsel %vm119, %v814, 0.0
  %819 = vadd.xlane.f32.xlu0 %v818
  %v820 = vpop.xlane.xlu0 %819
  %v821 = vmul.f32 %v817, %v210
  %v822 = vmul.f32 %v820, %v210
  %v823 = vmul.f32 %v811, %v811
  %v824 = vmul.f32 %v812, %v812
  %v825 = vsub.f32 %v821, %v823
  %v826 = vsub.f32 %v822, %v824
  %v827 = vsub.f32 %v803, %v811
  %v828 = vsub.f32 %v804, %v812
  %v829 = vadd.f32 %v825, 1e-05
  %v830 = vadd.f32 %v826, 1e-05
  %v831 = vrsqrt.pop %v829
  %v832 = vrsqrt.pop %v830
  %v833 = vmul.f32 %v827, %v831
  %v834 = vmul.f32 %v828, %v832
  %v835 = vld [vmem:[%s1 + $0xe8] sm:$0x1]
  %v836 = vld [vmem:[%s1 + $0xe9] sm:$0x1]
  %v837 = vlaneseq
  %v838 = vshrl.u32 %v837, 7
  %v839 = vsub.s32 0, %v838
  %v840 = vrot.slane %v835, %v839
  %v841 = vmul.f32 %v833, %v840
  %v842 = vmul.f32 %v834, %v840
  %v843 = vlaneseq
  %v844 = vshrl.u32 %v843, 7
  %v845 = vsub.s32 0, %v844
  %v846 = vrot.slane %v836, %v845
  %v847 = vadd.f32 %v841, %v846
  %v848 = vadd.f32 %v842, %v846
  %v849 = vsel %vm119, %v847, 0.0
  %850 = vadd.xlane.f32.xlu0 %v849
  %v851 = vpop.xlane.xlu0 %850
  %v852 = vsel %vm119, %v848, 0.0
  %853 = vadd.xlane.f32.xlu0 %v852
  %v854 = vpop.xlane.xlu0 %853
  %vm855 = vcmask 7168
  %856 = vst.msk [vmem:[%s3] sm:$0xff] %vm855, %v851
  %857 = vst.msk [vmem:[%s3 + $0x8] sm:$0xff] %vm855, %v854
  // Predicated region
  $region14: #{tpu_custom_call.1} parent=0 // pred_check
    _
  $region15: #{tpu_custom_call.1} parent=0 // pred_check_branch
    %859 = sbr.rel (0) target = $region17
  $region16: #{tpu_custom_call.1} parent=0 // pred_region
    _
  $region17: #{tpu_custom_call.1} parent=0 // pred_fallthru
    _
  // Predicated region
  $region18: #{tpu_custom_call.1} parent=0 // pred_check
    _
  $region19: #{tpu_custom_call.1} parent=0 // pred_check_branch
    %861 = sbr.rel (0) target = $region21
  $region20: #{tpu_custom_call.1} parent=0 // pred_region
    _
  $region21: #{tpu_custom_call.1} parent=0 // pred_fallthru
    _

</llo_original>
